<compile_context>
chip_gen: v7x
topology: tpu7x:2x2x1
jax: 0.10.0
libtpu: 0.0.40
codegen_flags: <defaults>
</compile_context>

<pallas_src>
import functools
import math

import jax
import jax.numpy as jnp
from jax.experimental import pallas as pl
from jax.experimental.pallas import tpu as pltpu


_VMEM_LIMIT_BYTES = 48 * 1024 * 1024  # above 32 MiB scoped default, below v7x 64 MiB ceiling


# ---------------------------------------------------------------------------
# Kernel bodies
# ---------------------------------------------------------------------------
def _layer_norm_f32(x, gamma, beta, eps):
    mu = jnp.mean(x, axis=-1, keepdims=True)
    c = x - mu
    var = jnp.mean(c * c, axis=-1, keepdims=True)
    return c * jax.lax.rsqrt(var + eps) * gamma + beta


def _qkv_proj_kernel(x_ref, wq_ref, wk_ref, wv_ref, bq_ref, bk_ref, bv_ref,
                     q_ref, k_ref, v_ref, *, inv_beta):
    x = x_ref[...].astype(jnp.float32)                      # (TN, D)
    xs = x * inv_beta                                       # q, k use x / beta
    q_ref[...] = (jnp.dot(xs, wq_ref[...], preferred_element_type=jnp.float32)
                  + bq_ref[...]).astype(q_ref.dtype)
    k_ref[...] = (jnp.dot(xs, wk_ref[...], preferred_element_type=jnp.float32)
                  + bk_ref[...]).astype(k_ref.dtype)
    v_ref[...] = (jnp.dot(x, wv_ref[...], preferred_element_type=jnp.float32)
                  + bv_ref[...]).astype(v_ref.dtype)


def _attention_kernel(q_ref, k_ref, v_ref, o_ref, *, scale):
    q = q_ref[0, 0, :, :].astype(jnp.float32)               # (S, E)
    k = k_ref[0, 0, :, :].astype(jnp.float32)               # (S, E)
    v = v_ref[0, 0, :, :].astype(jnp.float32)               # (S, E)
    # scores = q @ k^T * scale  (contract the head dim, no explicit transpose)
    s = jax.lax.dot_general(q, k, (((1,), (1,)), ((), ())),
                            preferred_element_type=jnp.float32) * scale
    m = jnp.max(s, axis=-1, keepdims=True)                  # stable softmax
    p = jnp.exp(s - m)
    p = p / jnp.sum(p, axis=-1, keepdims=True)
    o_ref[0, 0, :, :] = jnp.dot(
        p, v, preferred_element_type=jnp.float32).astype(o_ref.dtype)


def _mlp_norm_kernel(oc_ref, x_ref, wo_ref, bo_ref, g1_ref, bt1_ref,
                     w1_ref, b1_ref, w2_ref, b2_ref, g2_ref, bt2_ref,
                     out_ref, *, alpha, eps):
    oc = oc_ref[...].astype(jnp.float32)                    # (TN, D) head concat
    x = x_ref[...].astype(jnp.float32)                      # (TN, D) residual
    attn = (jnp.dot(oc, wo_ref[...], preferred_element_type=jnp.float32)
            + bo_ref[...])
    h = _layer_norm_f32(alpha * x + attn, g1_ref[...], bt1_ref[...], eps)
    z = (jnp.dot(h, w1_ref[...], preferred_element_type=jnp.float32)
         + b1_ref[...])
    z = jnp.maximum(z, 0.0)                                 # activation = relu
    f = (jnp.dot(z, w2_ref[...], preferred_element_type=jnp.float32)
         + b2_ref[...])
    out = _layer_norm_f32(alpha * h + f, g2_ref[...], bt2_ref[...], eps)
    out_ref[...] = out.astype(out_ref.dtype)


# ---------------------------------------------------------------------------
# Wrapper
# ---------------------------------------------------------------------------
def _pick_token_tile(n, cap=512):
    """Largest multiple of 8 that divides n and is <= cap (else n itself)."""
    if n <= cap:
        return n
    t = cap - cap % 8
    while t >= 8:
        if n % t == 0:
            return t
        t -= 8
    return n


def modified_transformer_encoder_layer(x, params, *, nhead, alpha=1.0,
                                       beta=1.0, layer_norm_eps=1e-5,
                                       token_tile_cap=512):
    """Post-norm ModifiedTransformerEncoderLayer forward (eval mode)."""
    B, S, D = x.shape
    assert D % nhead == 0, "d_model must be divisible by nhead"
    E = D // nhead
    N = B * S
    F = params["w1"].shape[1]
    dt = x.dtype
    itemsize = jnp.dtype(dt).itemsize

    tile_n = _pick_token_tile(N, token_tile_cap)
    n_tiles = N // tile_n

    x2d = x.reshape(N, D)

    row_spec = pl.BlockSpec((tile_n, D), lambda i: (i, 0))
    wspec = pl.BlockSpec((D, D), lambda i: (0, 0))
    bspec = pl.BlockSpec((1, D), lambda i: (0, 0))

    # ---- 1) QKV projection -------------------------------------------------
    qkv_kernel = functools.partial(_qkv_proj_kernel, inv_beta=1.0 / beta)
    q2d, k2d, v2d = pl.pallas_call(
        qkv_kernel,
        out_shape=(jax.ShapeDtypeStruct((N, D), dt),) * 3,
        grid_spec=pltpu.PrefetchScalarGridSpec(
            num_scalar_prefetch=0,
            grid=(n_tiles,),
            in_specs=[row_spec, wspec, wspec, wspec, bspec, bspec, bspec],
            out_specs=[row_spec, row_spec, row_spec],
        ),
        compiler_params=pltpu.CompilerParams(
            dimension_semantics=("parallel",),
            vmem_limit_bytes=_VMEM_LIMIT_BYTES),
        cost_estimate=pl.CostEstimate(
            flops=6 * N * D * D,
            transcendentals=0,
            bytes_accessed=(4 * N * D + 3 * D * D + 3 * D) * itemsize),
    )(x2d, params["wq"], params["wk"], params["wv"],
      params["bq"], params["bk"], params["bv"])

    # ---- 2) per-(batch, head) attention -------------------------------------
    def to_heads(a):                                        # (N, D) -> (B, H, S, E)
        return a.reshape(B, S, nhead, E).transpose(0, 2, 1, 3)

    qh, kh, vh = to_heads(q2d), to_heads(k2d), to_heads(v2d)

    attn_kernel = functools.partial(_attention_kernel,
                                    scale=1.0 / math.sqrt(E))
    head_spec = pl.BlockSpec((1, 1, S, E), lambda b, h: (b, h, 0, 0))
    oh = pl.pallas_call(
        attn_kernel,
        out_shape=jax.ShapeDtypeStruct((B, nhead, S, E), dt),
        grid_spec=pltpu.PrefetchScalarGridSpec(
            num_scalar_prefetch=0,
            grid=(B, nhead),
            in_specs=[head_spec, head_spec, head_spec],
            out_specs=head_spec,
        ),
        compiler_params=pltpu.CompilerParams(
            dimension_semantics=("parallel", "parallel"),
            vmem_limit_bytes=_VMEM_LIMIT_BYTES),
        cost_estimate=pl.CostEstimate(
            flops=4 * B * nhead * S * S * E,
            transcendentals=B * nhead * S * S,
            bytes_accessed=4 * B * nhead * S * E * itemsize),
    )(qh, kh, vh)

    oc2d = oh.transpose(0, 2, 1, 3).reshape(N, D)           # concat heads

    # ---- 3) out-proj + residual + LN1 + FFN + residual + LN2 ----------------
    mlp_kernel = functools.partial(_mlp_norm_kernel, alpha=alpha,
                                   eps=layer_norm_eps)
    w1_spec = pl.BlockSpec((D, F), lambda i: (0, 0))
    b1_spec = pl.BlockSpec((1, F), lambda i: (0, 0))
    w2_spec = pl.BlockSpec((F, D), lambda i: (0, 0))
    out2d = pl.pallas_call(
        mlp_kernel,
        out_shape=jax.ShapeDtypeStruct((N, D), dt),
        grid_spec=pltpu.PrefetchScalarGridSpec(
            num_scalar_prefetch=0,
            grid=(n_tiles,),
            in_specs=[row_spec, row_spec,
                      wspec, bspec, bspec, bspec,
                      w1_spec, b1_spec, w2_spec, bspec, bspec, bspec],
            out_specs=row_spec,
        ),
        compiler_params=pltpu.CompilerParams(
            dimension_semantics=("parallel",),
            vmem_limit_bytes=_VMEM_LIMIT_BYTES),
        cost_estimate=pl.CostEstimate(
            flops=2 * N * D * D + 4 * N * D * F + 20 * N * D,
            transcendentals=2 * N,
            bytes_accessed=(3 * N * D + D * D + 2 * D * F + 6 * D + F)
                           * itemsize),
    )(oc2d, x2d,
      params["wo"], params["bo"], params["g1"], params["bt1"],
      params["w1"], params["b1"], params["w2"], params["b2"],
      params["g2"], params["bt2"])

    return out2d.reshape(B, S, D)


# ---------------------------------------------------------------------------
# Pure-JAX reference of the same forward semantics
# ---------------------------------------------------------------------------
def _reference(x, params, *, nhead, alpha, beta, eps):
    B, S, D = x.shape
    E = D // nhead
    xs = x / beta
    q = xs @ params["wq"] + params["bq"][0]
    k = xs @ params["wk"] + params["bk"][0]
    v = x @ params["wv"] + params["bv"][0]

    def heads(a):
        return a.reshape(B, S, nhead, E).transpose(0, 2, 1, 3)

    qh, kh, vh = heads(q), heads(k), heads(v)
    s = jnp.einsum("bhqe,bhke->bhqk", qh, kh) * (1.0 / math.sqrt(E))
    p = jax.nn.softmax(s, axis=-1)
    o = jnp.einsum("bhqk,bhke->bhqe", p, vh)
    oc = o.transpose(0, 2, 1, 3).reshape(B, S, D)
    attn = oc @ params["wo"] + params["bo"][0]

    def ln(a, g, b):
        mu = a.mean(-1, keepdims=True)
        var = ((a - mu) ** 2).mean(-1, keepdims=True)
        return (a - mu) / jnp.sqrt(var + eps) * g + b

    h = ln(alpha * x + attn, params["g1"][0], params["bt1"][0])
    f = (jnp.maximum(h @ params["w1"] + params["b1"][0], 0.0)
         @ params["w2"] + params["b2"][0])
    return ln(alpha * h + f, params["g2"][0], params["bt2"][0])


if __name__ == "__main__":
    # Small shapes consistent with the module: batch=2, seq=8, d_model=32,
    # nhead=4, dim_feedforward=64.
    B, S, D, H, F = 2, 8, 32, 4, 64
    key = jax.random.PRNGKey(0)
    keys = jax.random.split(key, 13)
    sd = 1.0 / math.sqrt(D)
    sf = 1.0 / math.sqrt(F)
    params = {
        "wq": jax.random.normal(keys[0], (D, D), jnp.float32) * sd,
        "wk": jax.random.normal(keys[1], (D, D), jnp.float32) * sd,
        "wv": jax.random.normal(keys[2], (D, D), jnp.float32) * sd,
        "bq": jax.random.normal(keys[3], (1, D), jnp.float32) * 0.02,
        "bk": jax.random.normal(keys[4], (1, D), jnp.float32) * 0.02,
        "bv": jax.random.normal(keys[5], (1, D), jnp.float32) * 0.02,
        "wo": jax.random.normal(keys[6], (D, D), jnp.float32) * sd,
        "bo": jax.random.normal(keys[7], (1, D), jnp.float32) * 0.02,
        "g1": jnp.ones((1, D), jnp.float32),
        "bt1": jnp.zeros((1, D), jnp.float32),
        "w1": jax.random.normal(keys[8], (D, F), jnp.float32) * sd,
        "b1": jax.random.normal(keys[9], (1, F), jnp.float32) * 0.02,
        "w2": jax.random.normal(keys[10], (F, D), jnp.float32) * sf,
        "b2": jax.random.normal(keys[11], (1, D), jnp.float32) * 0.02,
        "g2": jnp.ones((1, D), jnp.float32),
        "bt2": jnp.zeros((1, D), jnp.float32),
    }
    x = jax.random.normal(keys[12], (B, S, D), jnp.float32)

    out = modified_transformer_encoder_layer(
        x, params, nhead=H, alpha=1.0, beta=1.0, layer_norm_eps=1e-5)
    out = jax.block_until_ready(out)

    with jax.default_matmul_precision("highest"):
        ref = _reference(x, params, nhead=H, alpha=1.0, beta=1.0, eps=1e-5)
    ref = jax.block_until_ready(ref)

    assert out.shape == (B, S, D)
    max_err = float(jnp.max(jnp.abs(out - ref)))
    assert jnp.allclose(out, ref, rtol=1e-3, atol=1e-3), max_err

    print("KERNEL_OK")
</pallas_src>

<mosaic_0001>
module attributes {stable_mosaic.version = 11 : i64} {
  func.func @_qkv_proj_kernel(%arg0: i32, %arg1: memref<16x32xf32, #tpu.memory_space<vmem>>, %arg2: memref<32x32xf32, #tpu.memory_space<vmem>>, %arg3: memref<32x32xf32, #tpu.memory_space<vmem>>, %arg4: memref<32x32xf32, #tpu.memory_space<vmem>>, %arg5: memref<1x32xf32, #tpu.memory_space<vmem>>, %arg6: memref<1x32xf32, #tpu.memory_space<vmem>>, %arg7: memref<1x32xf32, #tpu.memory_space<vmem>>, %arg8: memref<16x32xf32, #tpu.memory_space<vmem>>, %arg9: memref<16x32xf32, #tpu.memory_space<vmem>>, %arg10: memref<16x32xf32, #tpu.memory_space<vmem>>) attributes {dimension_semantics = [#tpu.dimension_semantics<parallel>], iteration_bounds = array<i64: 1>, scalar_prefetch = 0 : i64, scratch_operands = 0 : i64, tpu.core_type = #tpu.core_type<tc>, window_params = [{transform_indices = @transform_0, window_bounds = array<i64: 16, 32>}, {pipeline_mode = #tpu.pipeline_mode<synchronous>, transform_indices = @transform_1, window_bounds = array<i64: 32, 32>}, {pipeline_mode = #tpu.pipeline_mode<synchronous>, transform_indices = @transform_2, window_bounds = array<i64: 32, 32>}, {pipeline_mode = #tpu.pipeline_mode<synchronous>, transform_indices = @transform_3, window_bounds = array<i64: 32, 32>}, {pipeline_mode = #tpu.pipeline_mode<synchronous>, transform_indices = @transform_4, window_bounds = array<i64: 1, 32>}, {pipeline_mode = #tpu.pipeline_mode<synchronous>, transform_indices = @transform_5, window_bounds = array<i64: 1, 32>}, {pipeline_mode = #tpu.pipeline_mode<synchronous>, transform_indices = @transform_6, window_bounds = array<i64: 1, 32>}, {transform_indices = @transform_7, window_bounds = array<i64: 16, 32>}, {transform_indices = @transform_8, window_bounds = array<i64: 16, 32>}, {transform_indices = @transform_9, window_bounds = array<i64: 16, 32>}]} {
    %c0 = arith.constant 0 : index
    %c0_0 = arith.constant 0 : index
    %0 = vector.load %arg1[%c0, %c0_0] : memref<16x32xf32, #tpu.memory_space<vmem>>, vector<16x32xf32>
    %cst = arith.constant 1.000000e+00 : f32
    %1 = vector.broadcast %cst : f32 to vector<16x32xf32>
    %2 = arith.mulf %0, %1 : vector<16x32xf32>
    %c0_1 = arith.constant 0 : index
    %c0_2 = arith.constant 0 : index
    %3 = vector.load %arg2[%c0_1, %c0_2] : memref<32x32xf32, #tpu.memory_space<vmem>>, vector<32x32xf32>
    %cst_3 = arith.constant dense<0.000000e+00> : vector<16x32xf32>
    %4 = tpu.matmul %2, %3, %cst_3 {dimension_numbers = #tpu.dot_dimension_numbers<[1], [0], [0], [1], [0, 0, 1, 1], [], []>} : vector<16x32xf32>, vector<32x32xf32>, vector<16x32xf32> -> vector<16x32xf32>
    %c0_4 = arith.constant 0 : index
    %c0_5 = arith.constant 0 : index
    %5 = vector.load %arg5[%c0_4, %c0_5] : memref<1x32xf32, #tpu.memory_space<vmem>>, vector<1x32xf32>
    %6 = vector.broadcast %5 : vector<1x32xf32> to vector<16x32xf32>
    %7 = arith.addf %4, %6 : vector<16x32xf32>
    %c0_6 = arith.constant 0 : index
    %c0_7 = arith.constant 0 : index
    %8 = vector.load %arg8[%c0_6, %c0_7] : memref<16x32xf32, #tpu.memory_space<vmem>>, vector<16x32xf32>
    tpu.vector_store %arg8[%c0_6, %c0_7], %7 {strides = array<i32>} : memref<16x32xf32, #tpu.memory_space<vmem>>, vector<16x32xf32>,
    %c0_8 = arith.constant 0 : index
    %c0_9 = arith.constant 0 : index
    %9 = vector.load %arg3[%c0_8, %c0_9] : memref<32x32xf32, #tpu.memory_space<vmem>>, vector<32x32xf32>
    %cst_10 = arith.constant dense<0.000000e+00> : vector<16x32xf32>
    %10 = tpu.matmul %2, %9, %cst_10 {dimension_numbers = #tpu.dot_dimension_numbers<[1], [0], [0], [1], [0, 0, 1, 1], [], []>} : vector<16x32xf32>, vector<32x32xf32>, vector<16x32xf32> -> vector<16x32xf32>
    %c0_11 = arith.constant 0 : index
    %c0_12 = arith.constant 0 : index
    %11 = vector.load %arg6[%c0_11, %c0_12] : memref<1x32xf32, #tpu.memory_space<vmem>>, vector<1x32xf32>
    %12 = vector.broadcast %11 : vector<1x32xf32> to vector<16x32xf32>
    %13 = arith.addf %10, %12 : vector<16x32xf32>
    %c0_13 = arith.constant 0 : index
    %c0_14 = arith.constant 0 : index
    %14 = vector.load %arg9[%c0_13, %c0_14] : memref<16x32xf32, #tpu.memory_space<vmem>>, vector<16x32xf32>
    tpu.vector_store %arg9[%c0_13, %c0_14], %13 {strides = array<i32>} : memref<16x32xf32, #tpu.memory_space<vmem>>, vector<16x32xf32>,
    %c0_15 = arith.constant 0 : index
    %c0_16 = arith.constant 0 : index
    %15 = vector.load %arg4[%c0_15, %c0_16] : memref<32x32xf32, #tpu.memory_space<vmem>>, vector<32x32xf32>
    %cst_17 = arith.constant dense<0.000000e+00> : vector<16x32xf32>
    %16 = tpu.matmul %0, %15, %cst_17 {dimension_numbers = #tpu.dot_dimension_numbers<[1], [0], [0], [1], [0, 0, 1, 1], [], []>} : vector<16x32xf32>, vector<32x32xf32>, vector<16x32xf32> -> vector<16x32xf32>
    %c0_18 = arith.constant 0 : index
    %c0_19 = arith.constant 0 : index
    %17 = vector.load %arg7[%c0_18, %c0_19] : memref<1x32xf32, #tpu.memory_space<vmem>>, vector<1x32xf32>
    %18 = vector.broadcast %17 : vector<1x32xf32> to vector<16x32xf32>
    %19 = arith.addf %16, %18 : vector<16x32xf32>
    %c0_20 = arith.constant 0 : index
    %c0_21 = arith.constant 0 : index
    %20 = vector.load %arg10[%c0_20, %c0_21] : memref<16x32xf32, #tpu.memory_space<vmem>>, vector<16x32xf32>
    tpu.vector_store %arg10[%c0_20, %c0_21], %19 {strides = array<i32>} : memref<16x32xf32, #tpu.memory_space<vmem>>, vector<16x32xf32>,
    return
  }
  func.func @transform_0(%arg0: i32) -> (i32, i32) {
    %c0_i32 = arith.constant 0 : i32
    %c0_i32_0 = arith.constant 0 : i32
    return %arg0, %c0_i32 : i32, i32
  }
  func.func @transform_1(%arg0: i32) -> (i32, i32) {
    %c0_i32 = arith.constant 0 : i32
    %c0_i32_0 = arith.constant 0 : i32
    %c0_i32_1 = arith.constant 0 : i32
    return %c0_i32, %c0_i32_0 : i32, i32
  }
  func.func @transform_2(%arg0: i32) -> (i32, i32) {
    %c0_i32 = arith.constant 0 : i32
    %c0_i32_0 = arith.constant 0 : i32
    %c0_i32_1 = arith.constant 0 : i32
    return %c0_i32, %c0_i32_0 : i32, i32
  }
  func.func @transform_3(%arg0: i32) -> (i32, i32) {
    %c0_i32 = arith.constant 0 : i32
    %c0_i32_0 = arith.constant 0 : i32
    %c0_i32_1 = arith.constant 0 : i32
    return %c0_i32, %c0_i32_0 : i32, i32
  }
  func.func @transform_4(%arg0: i32) -> (i32, i32) {
    %c0_i32 = arith.constant 0 : i32
    %c0_i32_0 = arith.constant 0 : i32
    %c0_i32_1 = arith.constant 0 : i32
    return %c0_i32, %c0_i32_0 : i32, i32
  }
  func.func @transform_5(%arg0: i32) -> (i32, i32) {
    %c0_i32 = arith.constant 0 : i32
    %c0_i32_0 = arith.constant 0 : i32
    %c0_i32_1 = arith.constant 0 : i32
    return %c0_i32, %c0_i32_0 : i32, i32
  }
  func.func @transform_6(%arg0: i32) -> (i32, i32) {
    %c0_i32 = arith.constant 0 : i32
    %c0_i32_0 = arith.constant 0 : i32
    %c0_i32_1 = arith.constant 0 : i32
    return %c0_i32, %c0_i32_0 : i32, i32
  }
  func.func @transform_7(%arg0: i32) -> (i32, i32) {
    %c0_i32 = arith.constant 0 : i32
    %c0_i32_0 = arith.constant 0 : i32
    return %arg0, %c0_i32 : i32, i32
  }
  func.func @transform_8(%arg0: i32) -> (i32, i32) {
    %c0_i32 = arith.constant 0 : i32
    %c0_i32_0 = arith.constant 0 : i32
    return %arg0, %c0_i32 : i32, i32
  }
  func.func @transform_9(%arg0: i32) -> (i32, i32) {
    %c0_i32 = arith.constant 0 : i32
    %c0_i32_0 = arith.constant 0 : i32
    return %arg0, %c0_i32 : i32, i32
  }
}

</mosaic_0001>

<llo_original>
// kernel: tpu_custom_call.1
$region0: #{tpu_custom_call.1}
  #allocation0 [shape = 'u32[]', space=smem, size = 0x4, offset = 0x4, fixed_abs, tag = 'smem constant byte address 0x4 - core index']
  #allocation1 [shape = 'u32[144,128]{1,0:T(1,128)}', space=vmem, size = 0x12000, scoped, tag = 'internal scratch']
  %s0 = inlined_call_operand.hbm [shape: f32[16,32], index: 0, kind: input, shape index: {}]
  %s1 = inlined_call_operand.hbm [shape: f32[32,32], index: 1, kind: input, shape index: {}]
  %s2 = inlined_call_operand.hbm [shape: f32[32,32], index: 2, kind: input, shape index: {}]
  %s3 = inlined_call_operand.hbm [shape: f32[32,32], index: 3, kind: input, shape index: {}]
  %s4 = inlined_call_operand.vmem [shape: f32[1,32], index: 4, kind: input, shape index: {}]
  %s5 = inlined_call_operand.vmem [shape: f32[1,32], index: 5, kind: input, shape index: {}]
  %s6 = inlined_call_operand.vmem [shape: f32[1,32], index: 6, kind: input, shape index: {}]
  %s7 = inlined_call_operand.hbm [shape: f32[16,32], index: 7, kind: output, shape index: {0}]
  %s8 = inlined_call_operand.hbm [shape: f32[16,32], index: 8, kind: output, shape index: {1}]
  %s9 = inlined_call_operand.hbm [shape: f32[16,32], index: 9, kind: output, shape index: {2}]
  %10 = xla_tuple %s7, %s8, %s9
  %s11 = sld [smem:[#allocation0]]
  $region70: #{tpu_custom_call.1} parent=0
    _
  %s13 = ssub.s32 1, %s11
  %s14 = scalar_select 0, %s13, %s11
  $region1: #{tpu_custom_call.1} parent=0
    #allocation2 [shape = 'u8[8192]{0}', space=vmem, size = 0x2000, scoped, tag = 'input window, operand 0, single buffered']
    #allocation3 [shape = 's32[1]{0}', space=sflag, size = 0x4, scoped, tag = 'scoped memory for tpu_custom_call.1']
    #allocation4 [shape = 's32[1]{0}', space=sflag, size = 0x4, scoped, tag = 'scoped memory for tpu_custom_call.1']
    #allocation5 [shape = 'u8[16384]{0}', space=vmem, size = 0x4000, scoped, tag = 'input window, operand 1, single buffered']
    #allocation6 [shape = 's32[1]{0}', space=sflag, size = 0x4, scoped, tag = 'scoped memory for tpu_custom_call.1']
    #allocation7 [shape = 'u8[16384]{0}', space=vmem, size = 0x4000, scoped, tag = 'input window, operand 2, single buffered']
    #allocation8 [shape = 'u8[16384]{0}', space=vmem, size = 0x4000, scoped, tag = 'input window, operand 3, single buffered']
    #allocation9 [shape = 's32[1]{0}', space=sflag, size = 0x4, scoped, tag = 'scoped memory for tpu_custom_call.1']
    #allocation10 [shape = 'u8[8192]{0}', space=vmem, size = 0x2000, scoped, tag = 'output window, operand 0, single buffered']
    #allocation11 [shape = 'u8[8192]{0}', space=vmem, size = 0x2000, scoped, tag = 'output window, operand 1, single buffered']
    #allocation12 [shape = 's32[1]{0}', space=sflag, size = 0x4, scoped, tag = 'scoped memory for tpu_custom_call.1']
    #allocation13 [shape = 'u8[8192]{0}', space=vmem, size = 0x2000, scoped, tag = 'output window, operand 2, single buffered']
    %15 = vsyncpa [#allocation3], 0
    %16 = vsyncpa [#allocation6], 0
    %17 = vsyncpa [#allocation9], 0
    %18 = vsyncpa [#allocation4], 0
    %19 = vsyncpa [#allocation12], 0
    // Predicated region
    $region2: #{tpu_custom_call.1} parent=1 // pred_check
      _
    $region3: #{tpu_custom_call.1} parent=1 // pred_check_branch
      %21 = sbr.rel (0) target = $region5
    $region4: #{tpu_custom_call.1} parent=1 // pred_region
      %s23 = ssub.s32 256, 256
      %24 = vsyncadd [#allocation3], %s23
      %s25 = sshll.u32 [#allocation2], 4
      %s26 = int_to_ptr.vmem [resolvable:$true] %s25
      %31 = dma.hbm_to_vmem [thread:$0]  %s0, 256, %s26, [#allocation3], 128, 128, 8
    $region5: #{tpu_custom_call.1} parent=1 // pred_fallthru
      _
    // Predicated region
    $region6: #{tpu_custom_call.1} parent=1 // pred_check
      _
    $region7: #{tpu_custom_call.1} parent=1 // pred_check_branch
      %33 = sbr.rel (0) target = $region9
    $region8: #{tpu_custom_call.1} parent=1 // pred_region
      %s35 = ssub.s32 512, 512
      %36 = vsyncadd [#allocation6], %s35
      %s37 = sshll.u32 [#allocation5], 4
      %s38 = int_to_ptr.vmem [resolvable:$true] %s37
      %43 = dma.hbm_to_vmem [thread:$0]  %s1, 512, %s38, [#allocation6], 128, 128, 8
    $region9: #{tpu_custom_call.1} parent=1 // pred_fallthru
      _
    // Predicated region
    $region10: #{tpu_custom_call.1} parent=1 // pred_check
      _
    $region11: #{tpu_custom_call.1} parent=1 // pred_check_branch
      %45 = sbr.rel (0) target = $region13
    $region12: #{tpu_custom_call.1} parent=1 // pred_region
      %s47 = ssub.s32 512, 512
      %48 = vsyncadd [#allocation6], %s47
      %s49 = sshll.u32 [#allocation7], 4
      %s50 = int_to_ptr.vmem [resolvable:$true] %s49
      %55 = dma.hbm_to_vmem [thread:$0]  %s2, 512, %s50, [#allocation6], 128, 128, 8
    $region13: #{tpu_custom_call.1} parent=1 // pred_fallthru
      _
    // Predicated region
    $region14: #{tpu_custom_call.1} parent=1 // pred_check
      _
    $region15: #{tpu_custom_call.1} parent=1 // pred_check_branch
      %57 = sbr.rel (0) target = $region17
    $region16: #{tpu_custom_call.1} parent=1 // pred_region
      %s59 = ssub.s32 512, 512
      %60 = vsyncadd [#allocation9], %s59
      %s61 = sshll.u32 [#allocation8], 4
      %s62 = int_to_ptr.vmem [resolvable:$true] %s61
      %67 = dma.hbm_to_vmem [thread:$0]  %s3, 512, %s62, [#allocation9], 128, 128, 8
    $region17: #{tpu_custom_call.1} parent=1 // pred_fallthru
      _
    // Predicated region
    $region18: #{tpu_custom_call.1} parent=1 // pred_check
      _
    $region19: #{tpu_custom_call.1} parent=1 // pred_check_branch
      %69 = sbr.rel (0) target = $region21
    $region20: #{tpu_custom_call.1} parent=1 // pred_region
      _
    $region21: #{tpu_custom_call.1} parent=1 // pred_fallthru
      _
    // Predicated region
    $region22: #{tpu_custom_call.1} parent=1 // pred_check
      _
    $region23: #{tpu_custom_call.1} parent=1 // pred_check_branch
      %71 = sbr.rel (0) target = $region25
    $region24: #{tpu_custom_call.1} parent=1 // pred_region
      _
    $region25: #{tpu_custom_call.1} parent=1 // pred_fallthru
      _
    // Predicated region
    $region26: #{tpu_custom_call.1} parent=1 // pred_check
      _
    $region27: #{tpu_custom_call.1} parent=1 // pred_check_branch
      %73 = sbr.rel (0) target = $region29
    $region28: #{tpu_custom_call.1} parent=1 // pred_region
      _
    $region29: #{tpu_custom_call.1} parent=1 // pred_fallthru
      _
    // Predicated region
    $region30: #{tpu_custom_call.1} parent=1 // pred_check
      _
    $region31: #{tpu_custom_call.1} parent=1 // pred_check_branch
      %75 = sbr.rel (0) target = $region33
    $region32: #{tpu_custom_call.1} parent=1 // pred_region
      %76 = dma.done [#allocation3], 256
    $region33: #{tpu_custom_call.1} parent=1 // pred_fallthru
      _
    // Predicated region
    $region34: #{tpu_custom_call.1} parent=1 // pred_check
      _
    $region35: #{tpu_custom_call.1} parent=1 // pred_check_branch
      %78 = sbr.rel (0) target = $region37
    $region36: #{tpu_custom_call.1} parent=1 // pred_region
      %79 = dma.done [#allocation6], 512
    $region37: #{tpu_custom_call.1} parent=1 // pred_fallthru
      _
    // Predicated region
    $region38: #{tpu_custom_call.1} parent=1 // pred_check
      _
    $region39: #{tpu_custom_call.1} parent=1 // pred_check_branch
      %81 = sbr.rel (0) target = $region41
    $region40: #{tpu_custom_call.1} parent=1 // pred_region
      %82 = dma.done [#allocation6], 512
    $region41: #{tpu_custom_call.1} parent=1 // pred_fallthru
      _
    // Predicated region
    $region42: #{tpu_custom_call.1} parent=1 // pred_check
      _
    $region43: #{tpu_custom_call.1} parent=1 // pred_check_branch
      %84 = sbr.rel (0) target = $region45
    $region44: #{tpu_custom_call.1} parent=1 // pred_region
      %85 = dma.done [#allocation9], 512
    $region45: #{tpu_custom_call.1} parent=1 // pred_fallthru
      _
    %v86 = vld [vmem:[#allocation2] sm:$0xff]
    %v87 = vld [vmem:[#allocation2 + $0x8] sm:$0xff]
    %v88 = vld [vmem:[#allocation5] sm:$0xff]
    %v89 = vld [vmem:[#allocation5 + $0x8] sm:$0xff]
    %v90 = vld [vmem:[#allocation5 + $0x10] sm:$0xff]
    %v91 = vld [vmem:[#allocation5 + $0x18] sm:$0xff]
    %v92 = vld [vmem:[%s4] sm:$0x1]
    %v94 = vlaneseq
    %v95 = vshrl.u32 %v94, 7
    %v96 = vsub.s32 0, %v95
    %v97 = vrot.slane %v92, %v96
    %vm99 = vcmask 261120
    %v101 = vsel %vm99, %v86, 0
    %v104 = vsel %vm99, %v87, 0
    %106 = vmatprep.subr.mxu0 0.0
    %107 = vmatpush1.msra.mxu0 %v88
    %108 = vmatprep.subr.mxu0 0.0
    %109 = vmatpush1.msra.mxu0 %v89
    %110 = vmatprep.subr.mxu0 0.0
    %111 = vmatpush1.msra.mxu0 %v90
    %112 = vmatprep.subr.mxu0 0.0
    %113 = vmatpush1.msra.mxu0 %v91
    %114 = vmatprep.subr.mxu0 0.0
    %115 = vmatpush1.msra.mxu0 0.0
    %116 = vmatprep.subr.mxu0 0.0
    %117 = vmatpush1.msra.mxu0 0.0
    %118 = vmatprep.subr.mxu0 0.0
    %119 = vmatpush1.msra.mxu0 0.0
    %120 = vmatprep.subr.mxu0 0.0
    %121 = vmatpush1.msra.mxu0 0.0
    %122 = vmatprep.subr.mxu0 0.0
    %123 = vmatpush1.msra.mxu0 0.0
    %124 = vmatprep.subr.mxu0 0.0
    %125 = vmatpush1.msra.mxu0 0.0
    %126 = vmatprep.subr.mxu0 0.0
    %127 = vmatpush1.msra.mxu0 0.0
    %128 = vmatprep.subr.mxu0 0.0
    %129 = vmatpush1.msra.mxu0 0.0
    %130 = vmatprep.subr.mxu0 0.0
    %131 = vmatpush1.msra.mxu0 0.0
    %132 = vmatprep.subr.mxu0 0.0
    %133 = vmatpush1.msra.mxu0 0.0
    %134 = vmatprep.subr.mxu0 0.0
    %135 = vmatpush1.msra.mxu0 0.0
    %136 = vmatprep.subr.mxu0 0.0
    %137 = vmatpush1.msra.mxu0 0.0
    %138 = vmatprep.subr.mxu0 0.0
    %139 = vmatpush1.msra.mxu0 0.0
    %140 = vmatprep.subr.mxu0 0.0
    %141 = vmatpush1.msra.mxu0 0.0
    %142 = vmatprep.subr.mxu0 0.0
    %143 = vmatpush1.msra.mxu0 0.0
    %144 = vmatprep.subr.mxu0 0.0
    %145 = vmatpush1.msra.mxu0 0.0
    %146 = vmatprep.subr.mxu0 0.0
    %147 = vmatpush1.msra.mxu0 0.0
    %148 = vmatprep.subr.mxu0 0.0
    %149 = vmatpush1.msra.mxu0 0.0
    %150 = vmatprep.subr.mxu0 0.0
    %151 = vmatpush1.msra.mxu0 0.0
    %152 = vmatprep.subr.mxu0 0.0
    %153 = vmatpush1.msra.mxu0 0.0
    %154 = vmatprep.subr.mxu0 0.0
    %155 = vmatpush1.msra.mxu0 0.0
    %156 = vmatprep.subr.mxu0 0.0
    %157 = vmatpush1.msra.mxu0 0.0
    %158 = vmatprep.subr.mxu0 0.0
    %159 = vmatpush1.msra.mxu0 0.0
    %160 = vmatprep.subr.mxu0 0.0
    %161 = vmatpush1.msra.mxu0 0.0
    %162 = vmatprep.subr.mxu0 0.0
    %163 = vmatpush1.msra.mxu0 0.0
    %164 = vmatprep.subr.mxu0 0.0
    %165 = vmatpush1.msra.mxu0 0.0
    %166 = vmatprep.subr.mxu0 0.0
    %167 = vmatpush1.msra.mxu0 0.0
    %168 = vmatprep.subr.mxu0 0.0
    %169 = vmatpush1.msra.mxu0 0.0
    %170 = vmatprep.mubr.f32.mxu0 0.0
    %171 = vmatmul.mubr.f32.gmra.mrb[0].mxu0 %v101
    %v172 = vpop.f32.mrb[0].mxu0
    %v173 = vadd.f32 %v97, %v172
    %v174 = vpop.f32.mrb[0].mxu0
    %175 = vmatprep.mubr.f32.mxu0 0.0
    %176 = vmatmul.mubr.f32.gmra.mrb[0].mxu0 %v104
    %v177 = vpop.f32.mrb[0].mxu0
    %v178 = vadd.f32 %v97, %v177
    %v179 = vpop.f32.mrb[0].mxu0
    %180 = vdwg.mxu0
    %181 = vst.msk [vmem:[#allocation10] sm:$0xff] %vm99, %v173
    %182 = vst.msk [vmem:[#allocation10 + $0x8] sm:$0xff] %vm99, %v178
    %v183 = vld [vmem:[#allocation7] sm:$0xff]
    %v184 = vld [vmem:[#allocation7 + $0x8] sm:$0xff]
    %v185 = vld [vmem:[#allocation7 + $0x10] sm:$0xff]
    %v186 = vld [vmem:[#allocation7 + $0x18] sm:$0xff]
    %v187 = vld [vmem:[%s5] sm:$0x1]
    %v189 = vlaneseq
    %v190 = vshrl.u32 %v189, 7
    %v191 = vsub.s32 0, %v190
    %v192 = vrot.slane %v187, %v191
    %194 = vmatprep.subr.mxu0 0.0
    %195 = vmatpush1.msra.mxu0 %v183
    %196 = vmatprep.subr.mxu0 0.0
    %197 = vmatpush1.msra.mxu0 %v184
    %198 = vmatprep.subr.mxu0 0.0
    %199 = vmatpush1.msra.mxu0 %v185
    %200 = vmatprep.subr.mxu0 0.0
    %201 = vmatpush1.msra.mxu0 %v186
    %202 = vmatprep.subr.mxu0 0.0
    %203 = vmatpush1.msra.mxu0 0.0
    %204 = vmatprep.subr.mxu0 0.0
    %205 = vmatpush1.msra.mxu0 0.0
    %206 = vmatprep.subr.mxu0 0.0
    %207 = vmatpush1.msra.mxu0 0.0
    %208 = vmatprep.subr.mxu0 0.0
    %209 = vmatpush1.msra.mxu0 0.0
    %210 = vmatprep.subr.mxu0 0.0
    %211 = vmatpush1.msra.mxu0 0.0
    %212 = vmatprep.subr.mxu0 0.0
    %213 = vmatpush1.msra.mxu0 0.0
    %214 = vmatprep.subr.mxu0 0.0
    %215 = vmatpush1.msra.mxu0 0.0
    %216 = vmatprep.subr.mxu0 0.0
    %217 = vmatpush1.msra.mxu0 0.0
    %218 = vmatprep.subr.mxu0 0.0
    %219 = vmatpush1.msra.mxu0 0.0
    %220 = vmatprep.subr.mxu0 0.0
    %221 = vmatpush1.msra.mxu0 0.0
    %222 = vmatprep.subr.mxu0 0.0
    %223 = vmatpush1.msra.mxu0 0.0
    %224 = vmatprep.subr.mxu0 0.0
    %225 = vmatpush1.msra.mxu0 0.0
    %226 = vmatprep.subr.mxu0 0.0
    %227 = vmatpush1.msra.mxu0 0.0
    %228 = vmatprep.subr.mxu0 0.0
    %229 = vmatpush1.msra.mxu0 0.0
    %230 = vmatprep.subr.mxu0 0.0
    %231 = vmatpush1.msra.mxu0 0.0
    %232 = vmatprep.subr.mxu0 0.0
    %233 = vmatpush1.msra.mxu0 0.0
    %234 = vmatprep.subr.mxu0 0.0
    %235 = vmatpush1.msra.mxu0 0.0
    %236 = vmatprep.subr.mxu0 0.0
    %237 = vmatpush1.msra.mxu0 0.0
    %238 = vmatprep.subr.mxu0 0.0
    %239 = vmatpush1.msra.mxu0 0.0
    %240 = vmatprep.subr.mxu0 0.0
    %241 = vmatpush1.msra.mxu0 0.0
    %242 = vmatprep.subr.mxu0 0.0
    %243 = vmatpush1.msra.mxu0 0.0
    %244 = vmatprep.subr.mxu0 0.0
    %245 = vmatpush1.msra.mxu0 0.0
    %246 = vmatprep.subr.mxu0 0.0
    %247 = vmatpush1.msra.mxu0 0.0
    %248 = vmatprep.subr.mxu0 0.0
    %249 = vmatpush1.msra.mxu0 0.0
    %250 = vmatprep.subr.mxu0 0.0
    %251 = vmatpush1.msra.mxu0 0.0
    %252 = vmatprep.subr.mxu0 0.0
    %253 = vmatpush1.msra.mxu0 0.0
    %254 = vmatprep.subr.mxu0 0.0
    %255 = vmatpush1.msra.mxu0 0.0
    %256 = vmatprep.subr.mxu0 0.0
    %257 = vmatpush1.msra.mxu0 0.0
    %258 = vmatprep.mubr.f32.mxu0 0.0
    %259 = vmatmul.mubr.f32.gmra.mrb[0].mxu0 %v101
    %v260 = vpop.f32.mrb[0].mxu0
    %v261 = vadd.f32 %v192, %v260
    %v262 = vpop.f32.mrb[0].mxu0
    %263 = vmatprep.mubr.f32.mxu0 0.0
    %264 = vmatmul.mubr.f32.gmra.mrb[0].mxu0 %v104
    %v265 = vpop.f32.mrb[0].mxu0
    %v266 = vadd.f32 %v192, %v265
    %v267 = vpop.f32.mrb[0].mxu0
    %268 = vdwg.mxu0
    %269 = vst.msk [vmem:[#allocation11] sm:$0xff] %vm99, %v261
    %270 = vst.msk [vmem:[#allocation11 + $0x8] sm:$0xff] %vm99, %v266
    %v271 = vld [vmem:[#allocation8] sm:$0xff]
    %v272 = vld [vmem:[#allocation8 + $0x8] sm:$0xff]
    %v273 = vld [vmem:[#allocation8 + $0x10] sm:$0xff]
    %v274 = vld [vmem:[#allocation8 + $0x18] sm:$0xff]
    %v275 = vld [vmem:[%s6] sm:$0x1]
    %v277 = vlaneseq
    %v278 = vshrl.u32 %v277, 7
    %v279 = vsub.s32 0, %v278
    %v280 = vrot.slane %v275, %v279
    %282 = vmatprep.subr.mxu0 0.0
    %283 = vmatpush1.msra.mxu0 %v271
    %284 = vmatprep.subr.mxu0 0.0
    %285 = vmatpush1.msra.mxu0 %v272
    %286 = vmatprep.subr.mxu0 0.0
    %287 = vmatpush1.msra.mxu0 %v273
    %288 = vmatprep.subr.mxu0 0.0
    %289 = vmatpush1.msra.mxu0 %v274
    %290 = vmatprep.subr.mxu0 0.0
    %291 = vmatpush1.msra.mxu0 0.0
    %292 = vmatprep.subr.mxu0 0.0
    %293 = vmatpush1.msra.mxu0 0.0
    %294 = vmatprep.subr.mxu0 0.0
    %295 = vmatpush1.msra.mxu0 0.0
    %296 = vmatprep.subr.mxu0 0.0
    %297 = vmatpush1.msra.mxu0 0.0
    %298 = vmatprep.subr.mxu0 0.0
    %299 = vmatpush1.msra.mxu0 0.0
    %300 = vmatprep.subr.mxu0 0.0
    %301 = vmatpush1.msra.mxu0 0.0
    %302 = vmatprep.subr.mxu0 0.0
    %303 = vmatpush1.msra.mxu0 0.0
    %304 = vmatprep.subr.mxu0 0.0
    %305 = vmatpush1.msra.mxu0 0.0
    %306 = vmatprep.subr.mxu0 0.0
    %307 = vmatpush1.msra.mxu0 0.0
    %308 = vmatprep.subr.mxu0 0.0
    %309 = vmatpush1.msra.mxu0 0.0
    %310 = vmatprep.subr.mxu0 0.0
    %311 = vmatpush1.msra.mxu0 0.0
    %312 = vmatprep.subr.mxu0 0.0
    %313 = vmatpush1.msra.mxu0 0.0
    %314 = vmatprep.subr.mxu0 0.0
    %315 = vmatpush1.msra.mxu0 0.0
    %316 = vmatprep.subr.mxu0 0.0
    %317 = vmatpush1.msra.mxu0 0.0
    %318 = vmatprep.subr.mxu0 0.0
    %319 = vmatpush1.msra.mxu0 0.0
    %320 = vmatprep.subr.mxu0 0.0
    %321 = vmatpush1.msra.mxu0 0.0
    %322 = vmatprep.subr.mxu0 0.0
    %323 = vmatpush1.msra.mxu0 0.0
    %324 = vmatprep.subr.mxu0 0.0
    %325 = vmatpush1.msra.mxu0 0.0
    %326 = vmatprep.subr.mxu0 0.0
    %327 = vmatpush1.msra.mxu0 0.0
    %328 = vmatprep.subr.mxu0 0.0
    %329 = vmatpush1.msra.mxu0 0.0
    %330 = vmatprep.subr.mxu0 0.0
    %331 = vmatpush1.msra.mxu0 0.0
    %332 = vmatprep.subr.mxu0 0.0
    %333 = vmatpush1.msra.mxu0 0.0
    %334 = vmatprep.subr.mxu0 0.0
    %335 = vmatpush1.msra.mxu0 0.0
    %336 = vmatprep.subr.mxu0 0.0
    %337 = vmatpush1.msra.mxu0 0.0
    %338 = vmatprep.subr.mxu0 0.0
    %339 = vmatpush1.msra.mxu0 0.0
    %340 = vmatprep.subr.mxu0 0.0
    %341 = vmatpush1.msra.mxu0 0.0
    %342 = vmatprep.subr.mxu0 0.0
    %343 = vmatpush1.msra.mxu0 0.0
    %344 = vmatprep.subr.mxu0 0.0
    %345 = vmatpush1.msra.mxu0 0.0
    %346 = vmatprep.mubr.f32.mxu0 0.0
    %347 = vmatmul.mubr.f32.gmra.mrb[0].mxu0 %v101
    %v348 = vpop.f32.mrb[0].mxu0
    %v349 = vadd.f32 %v280, %v348
    %v350 = vpop.f32.mrb[0].mxu0
    %351 = vmatprep.mubr.f32.mxu0 0.0
    %352 = vmatmul.mubr.f32.gmra.mrb[0].mxu0 %v104
    %v353 = vpop.f32.mrb[0].mxu0
    %v354 = vadd.f32 %v280, %v353
    %v355 = vpop.f32.mrb[0].mxu0
    %356 = vdwg.mxu0
    %357 = vst.msk [vmem:[#allocation13] sm:$0xff] %vm99, %v349
    %358 = vst.msk [vmem:[#allocation13 + $0x8] sm:$0xff] %vm99, %v354
    // Predicated region
    $region46: #{tpu_custom_call.1} parent=1 // pred_check
      _
    $region47: #{tpu_custom_call.1} parent=1 // pred_check_branch
      %360 = sbr.rel (0) target = $region49
    $region48: #{tpu_custom_call.1} parent=1 // pred_region
      %s362 = ssub.s32 256, 256
      %363 = vsyncadd [#allocation4], %s362
      %s364 = sshll.u32 [#allocation10], 4
      %s365 = int_to_ptr.vmem [resolvable:$true] %s364
      %370 = dma.vmem_to_hbm [thread:$0]  %s365, 256, %s7, [#allocation4], 128, 128, 8
    $region49: #{tpu_custom_call.1} parent=1 // pred_fallthru
      _
    // Predicated region
    $region50: #{tpu_custom_call.1} parent=1 // pred_check
      _
    $region51: #{tpu_custom_call.1} parent=1 // pred_check_branch
      %372 = sbr.rel (0) target = $region53
    $region52: #{tpu_custom_call.1} parent=1 // pred_region
      %s374 = ssub.s32 256, 256
      %375 = vsyncadd [#allocation12], %s374
      %s376 = sshll.u32 [#allocation11], 4
      %s377 = int_to_ptr.vmem [resolvable:$true] %s376
      %382 = dma.vmem_to_hbm [thread:$0]  %s377, 256, %s8, [#allocation12], 128, 128, 8
    $region53: #{tpu_custom_call.1} parent=1 // pred_fallthru
      _
    // Predicated region
    $region54: #{tpu_custom_call.1} parent=1 // pred_check
      _
    $region55: #{tpu_custom_call.1} parent=1 // pred_check_branch
      %384 = sbr.rel (0) target = $region57
    $region56: #{tpu_custom_call.1} parent=1 // pred_region
      %s386 = ssub.s32 256, 256
      %387 = vsyncadd [#allocation12], %s386
      %s388 = sshll.u32 [#allocation13], 4
      %s389 = int_to_ptr.vmem [resolvable:$true] %s388
      %394 = dma.vmem_to_hbm [thread:$0]  %s389, 256, %s9, [#allocation12], 128, 128, 8
    $region57: #{tpu_custom_call.1} parent=1 // pred_fallthru
      _
    // Predicated region
    $region58: #{tpu_custom_call.1} parent=1 // pred_check
      _
    $region59: #{tpu_custom_call.1} parent=1 // pred_check_branch
      %396 = sbr.rel (0) target = $region61
    $region60: #{tpu_custom_call.1} parent=1 // pred_region
      %397 = dma.done [#allocation4], 256
    $region61: #{tpu_custom_call.1} parent=1 // pred_fallthru
      _
    // Predicated region
    $region62: #{tpu_custom_call.1} parent=1 // pred_check
      _
    $region63: #{tpu_custom_call.1} parent=1 // pred_check_branch
      %399 = sbr.rel (0) target = $region65
    $region64: #{tpu_custom_call.1} parent=1 // pred_region
      %400 = dma.done [#allocation12], 256
    $region65: #{tpu_custom_call.1} parent=1 // pred_fallthru
      _
    // Predicated region
    $region66: #{tpu_custom_call.1} parent=1 // pred_check
      _
    $region67: #{tpu_custom_call.1} parent=1 // pred_check_branch
      %402 = sbr.rel (0) target = $region69
    $region68: #{tpu_custom_call.1} parent=1 // pred_region
      %403 = dma.done [#allocation12], 256
    $region69: #{tpu_custom_call.1} parent=1 // pred_fallthru
      _
    %404 = vsyncpa [#allocation3], 1
    %405 = vsyncpa [#allocation6], 1
    %406 = vsyncpa [#allocation9], 1
    %407 = vsyncpa [#allocation4], 1
    %408 = vsyncpa [#allocation12], 1

</llo_original>
